<compile_context>
chip_gen: v7x
topology: tpu7x:2x2x1
jax: 0.10.0
libtpu: 0.0.40
codegen_flags: <defaults>
</compile_context>

<pallas_src>
import jax
import jax.numpy as jnp
from jax.experimental import pallas as pl
from jax.experimental.pallas import tpu as pltpu

_LANE = 128  # TPU lane width; lane-dense output / MXU-friendly hidden dims


def _round_up(x, m):
    return ((x + m - 1) // m) * m


def _choose_tile_n(n, max_tile=2048, min_tile=256):
    """Biggest row tile (amortizes per-step overhead) that still leaves a grid
    of >=4 steps where possible (so v7x's 2 parallel TCs each keep >=2 steps
    of double-buffering)."""
    tile = max_tile
    while tile > min_tile and pl.cdiv(n, tile) < 4:
        tile //= 2
    return tile


def _mlp_kernel(x_ref, w1_ref, b1_ref, w2_ref, b2_ref, o_ref):
    # (tile_n, K) @ (K, H) on the MXU with f32 accumulation, f32 bias + ReLU on
    # the VPU, then (tile_n, H) @ (H, T) and the second bias.  x's contraction
    # dim K = fea_dim is left unpadded (MXU is nowhere near saturated here).
    h = jnp.dot(x_ref[...], w1_ref[...], preferred_element_type=jnp.float32)
    h = jnp.maximum(h + b1_ref[...], 0.0)  # ReLU, f32 epilogue
    y = jnp.dot(h.astype(w2_ref.dtype), w2_ref[...],
                preferred_element_type=jnp.float32) + b2_ref[...]
    o_ref[...] = y.astype(o_ref.dtype)


def prepare_params(params, matmul_dtype=None):
    """One-time padding/casting of the weights (hoisted out of the hot path).

    hidden/target are zero-padded to multiples of 128 (numerically exact:
    padded hidden columns produce ReLU(0)=0 and hit zero W2 rows).  Weights are
    cast to `matmul_dtype` (e.g. bf16 on v6e/v7x); biases stay f32."""
    w1, b1, w2, b2 = params["w1"], params["b1"], params["w2"], params["b2"]
    fea_dim, hidden = w1.shape
    target = w2.shape[1]
    h_pad = _round_up(hidden, _LANE)
    t_pad = _round_up(target, _LANE)
    wdt = jnp.dtype(matmul_dtype) if matmul_dtype is not None else w1.dtype

    w1_p = jnp.pad(w1, ((0, 0), (0, h_pad - hidden))).astype(wdt)
    w2_p = jnp.pad(w2, ((0, h_pad - hidden), (0, t_pad - target))).astype(wdt)
    b1_p = jnp.pad(b1.astype(jnp.float32).reshape(1, hidden),
                   ((0, 0), (0, h_pad - hidden)))
    b2_p = jnp.pad(b2.astype(jnp.float32).reshape(1, target),
                   ((0, 0), (0, t_pad - target)))
    return {"w1": w1_p, "b1": b1_p, "w2": w2_p, "b2": b2_p,
            "fea_dim": fea_dim, "hidden": hidden, "target": target,
            "matmul_dtype": wdt}


def mlp_classifier_forward(x, params, batch=None, *, prepared=None, tile_n=None,
                           matmul_dtype=None, min_rows_for_pallas=2048,
                           max_tile_n=2048):
    """Pallas equivalent of MLPClassifier.forward(x, batch).

    `batch` is unused (matches the PyTorch module).  `params` holds the raw
    [in, out] weights; `prepared` (from prepare_params) is the once-padded
    version used on the Pallas path."""
    del batch  # unused by the module's forward
    n, fea_dim = x.shape
    target = params["w2"].shape[1]

    # Small problems: pad + pallas_call + slice fixed costs exceed any kernel
    # gain; XLA's fused matmul path wins.
    if n < min_rows_for_pallas:
        h = jnp.maximum(x @ params["w1"] + params["b1"][None, :], 0.0)
        return h @ params["w2"] + params["b2"][None, :]

    if prepared is None:
        prepared = prepare_params(params, matmul_dtype)
    w1_p, b1_p = prepared["w1"], prepared["b1"]
    w2_p, b2_p = prepared["w2"], prepared["b2"]
    h_pad = w1_p.shape[1]
    t_pad = w2_p.shape[1]
    wdt = prepared["matmul_dtype"]
    out_dt = x.dtype

    if tile_n is None:
        tile_n = _choose_tile_n(n, max_tile_n)
    tile_n = max(8, _round_up(int(tile_n), 8))
    n_pad = _round_up(n, tile_n)

    # x: cast (e.g. to bf16) for the matmul and pad rows only up to the tile.
    x_p = x.astype(wdt) if x.dtype != wdt else x
    if n_pad != n:
        x_p = jnp.pad(x_p, ((0, n_pad - n), (0, 0)))

    cost = pl.CostEstimate(
        flops=2 * n_pad * (fea_dim * h_pad + h_pad * t_pad),
        transcendentals=0,
        bytes_accessed=(x_p.size * x_p.dtype.itemsize
                        + w1_p.size * w1_p.dtype.itemsize
                        + w2_p.size * w2_p.dtype.itemsize
                        + (b1_p.size + b2_p.size) * 4
                        + n_pad * t_pad * jnp.dtype(out_dt).itemsize),
    )

    out_p = pl.pallas_call(
        _mlp_kernel,
        out_shape=jax.ShapeDtypeStruct((n_pad, t_pad), out_dt),
        grid_spec=pltpu.PrefetchScalarGridSpec(
            num_scalar_prefetch=0,
            grid=(n_pad // tile_n,),
            in_specs=[
                # x: row-tiled, contraction dim left at fea_dim (full last dim).
                pl.BlockSpec((tile_n, fea_dim), lambda i: (i, 0)),
                pl.BlockSpec((fea_dim, h_pad), lambda i: (0, 0)),  # W1 resident
                pl.BlockSpec((1, h_pad), lambda i: (0, 0)),        # b1 resident
                pl.BlockSpec((h_pad, t_pad), lambda i: (0, 0)),    # W2 resident
                pl.BlockSpec((1, t_pad), lambda i: (0, 0)),        # b2 resident
            ],
            out_specs=pl.BlockSpec((tile_n, t_pad), lambda i: (i, 0)),
        ),
        compiler_params=pltpu.CompilerParams(
            # Row axis is embarrassingly parallel -> 2 TCs on v7x, no-op elsewhere.
            dimension_semantics=("parallel",),
            # Working set is a few MiB; 32 MiB is safely below every chip's VMEM.
            vmem_limit_bytes=32 * 1024 * 1024,
        ),
        cost_estimate=cost,
    )(x_p, w1_p, b1_p, w2_p, b2_p)

    # Strip row padding and the lane-dense column padding back to logical shape.
    return out_p[:n, :target]


def init_params(fea_dim, hidden_units, target_dim, dtype=jnp.float32):
    """Deterministic synthetic parameters matching nn.Linear init
    (weights stored transposed as [in, out], biases as 1-D)."""
    k = jax.random.PRNGKey(0)
    k1, k2, k3, k4 = jax.random.split(k, 4)
    bound1 = 1.0 / (fea_dim ** 0.5)
    bound2 = 1.0 / (hidden_units ** 0.5)
    return {
        "w1": jax.random.uniform(k1, (fea_dim, hidden_units), dtype, -bound1, bound1),
        "b1": jax.random.uniform(k2, (hidden_units,), dtype, -bound1, bound1),
        "w2": jax.random.uniform(k3, (hidden_units, target_dim), dtype, -bound2, bound2),
        "b2": jax.random.uniform(k4, (target_dim,), dtype, -bound2, bound2),
    }


def _reference(x, params):
    h = jnp.maximum(x @ params["w1"] + params["b1"].reshape(1, -1), 0.0)
    return h @ params["w2"] + params["b2"].reshape(1, -1)


if __name__ == "__main__":
    # Small shapes consistent with the module: N rows of graph-level features.
    N, fea_dim, hidden_units, target_dim = 1024, 16, 32, 4

    key = jax.random.PRNGKey(0)
    kx, kb = jax.random.split(key)
    x = jax.random.normal(kx, (N, fea_dim), dtype=jnp.float32)
    batch = jax.random.randint(kb, (N,), 0, 2)  # unused by forward, as in PyTorch

    params = init_params(fea_dim, hidden_units, target_dim)
    ref = _reference(x, params)

    # --- Pallas path, f32, weights padded once, 4-step row grid ---
    prep = prepare_params(params)
    out = mlp_classifier_forward(x, params, batch, prepared=prep, tile_n=256,
                                 min_rows_for_pallas=0)
    out = jax.block_until_ready(out)
    assert out.shape == (N, target_dim)
    assert jnp.allclose(out, ref, atol=1e-5, rtol=1e-5)

    # --- Pallas path with bf16 matmul inputs (f32 accumulation / epilogue) ---
    prep_bf16 = prepare_params(params, matmul_dtype=jnp.bfloat16)
    out_bf16 = mlp_classifier_forward(x, params, batch, prepared=prep_bf16,
                                      tile_n=256, min_rows_for_pallas=0)
    out_bf16 = jax.block_until_ready(out_bf16)
    assert out_bf16.shape == (N, target_dim)
    assert jnp.allclose(out_bf16, ref, atol=5e-2, rtol=5e-2)

    # --- Small-N path (default threshold -> fused XLA path) also matches ---
    small = mlp_classifier_forward(x[:64], params, batch[:64])
    small = jax.block_until_ready(small)
    assert jnp.allclose(small, ref[:64], atol=1e-5, rtol=1e-5)

    print("KERNEL_OK")
</pallas_src>

<mosaic_0001>
module attributes {stable_mosaic.version = 11 : i64} {
  func.func @_mlp_kernel(%arg0: i32, %arg1: memref<256x16xf32, #tpu.memory_space<vmem>>, %arg2: memref<16x128xf32, #tpu.memory_space<vmem>>, %arg3: memref<1x128xf32, #tpu.memory_space<vmem>>, %arg4: memref<128x128xf32, #tpu.memory_space<vmem>>, %arg5: memref<1x128xf32, #tpu.memory_space<vmem>>, %arg6: memref<256x128xf32, #tpu.memory_space<vmem>>) attributes {dimension_semantics = [#tpu.dimension_semantics<parallel>], iteration_bounds = array<i64: 4>, scalar_prefetch = 0 : i64, scratch_operands = 0 : i64, tpu.core_type = #tpu.core_type<tc>, window_params = [{transform_indices = @transform_0, window_bounds = array<i64: 256, 16>}, {pipeline_mode = #tpu.pipeline_mode<synchronous>, transform_indices = @transform_1, window_bounds = array<i64: 16, 128>}, {pipeline_mode = #tpu.pipeline_mode<synchronous>, transform_indices = @transform_2, window_bounds = array<i64: 1, 128>}, {pipeline_mode = #tpu.pipeline_mode<synchronous>, transform_indices = @transform_3, window_bounds = array<i64: 128, 128>}, {pipeline_mode = #tpu.pipeline_mode<synchronous>, transform_indices = @transform_4, window_bounds = array<i64: 1, 128>}, {transform_indices = @transform_5, window_bounds = array<i64: 256, 128>}]} {
    %c0 = arith.constant 0 : index
    %c0_0 = arith.constant 0 : index
    %0 = vector.load %arg1[%c0, %c0_0] : memref<256x16xf32, #tpu.memory_space<vmem>>, vector<256x16xf32>
    %c0_1 = arith.constant 0 : index
    %c0_2 = arith.constant 0 : index
    %1 = vector.load %arg2[%c0_1, %c0_2] : memref<16x128xf32, #tpu.memory_space<vmem>>, vector<16x128xf32>
    %cst = arith.constant dense<0.000000e+00> : vector<256x128xf32>
    %2 = tpu.matmul %0, %1, %cst {dimension_numbers = #tpu.dot_dimension_numbers<[1], [0], [0], [1], [0, 0, 1, 1], [], []>} : vector<256x16xf32>, vector<16x128xf32>, vector<256x128xf32> -> vector<256x128xf32>
    %c0_3 = arith.constant 0 : index
    %c0_4 = arith.constant 0 : index
    %3 = vector.load %arg3[%c0_3, %c0_4] : memref<1x128xf32, #tpu.memory_space<vmem>>, vector<1x128xf32>
    %4 = vector.broadcast %3 : vector<1x128xf32> to vector<256x128xf32>
    %5 = arith.addf %2, %4 : vector<256x128xf32>
    %cst_5 = arith.constant 0.000000e+00 : f32
    %6 = vector.broadcast %cst_5 : f32 to vector<256x128xf32>
    %7 = arith.maximumf %5, %6 : vector<256x128xf32>
    %c0_6 = arith.constant 0 : index
    %c0_7 = arith.constant 0 : index
    %8 = vector.load %arg4[%c0_6, %c0_7] : memref<128x128xf32, #tpu.memory_space<vmem>>, vector<128x128xf32>
    %cst_8 = arith.constant dense<0.000000e+00> : vector<256x128xf32>
    %9 = tpu.matmul %7, %8, %cst_8 {dimension_numbers = #tpu.dot_dimension_numbers<[1], [0], [0], [1], [0, 0, 1, 1], [], []>} : vector<256x128xf32>, vector<128x128xf32>, vector<256x128xf32> -> vector<256x128xf32>
    %c0_9 = arith.constant 0 : index
    %c0_10 = arith.constant 0 : index
    %10 = vector.load %arg5[%c0_9, %c0_10] : memref<1x128xf32, #tpu.memory_space<vmem>>, vector<1x128xf32>
    %11 = vector.broadcast %10 : vector<1x128xf32> to vector<256x128xf32>
    %12 = arith.addf %9, %11 : vector<256x128xf32>
    %c0_11 = arith.constant 0 : index
    %c0_12 = arith.constant 0 : index
    %13 = vector.load %arg6[%c0_11, %c0_12] : memref<256x128xf32, #tpu.memory_space<vmem>>, vector<256x128xf32>
    tpu.vector_store %arg6[%c0_11, %c0_12], %12 {strides = array<i32>} : memref<256x128xf32, #tpu.memory_space<vmem>>, vector<256x128xf32>,
    return
  }
  func.func @transform_0(%arg0: i32) -> (i32, i32) {
    %c0_i32 = arith.constant 0 : i32
    %c0_i32_0 = arith.constant 0 : i32
    return %arg0, %c0_i32 : i32, i32
  }
  func.func @transform_1(%arg0: i32) -> (i32, i32) {
    %c0_i32 = arith.constant 0 : i32
    %c0_i32_0 = arith.constant 0 : i32
    %c0_i32_1 = arith.constant 0 : i32
    return %c0_i32, %c0_i32_0 : i32, i32
  }
  func.func @transform_2(%arg0: i32) -> (i32, i32) {
    %c0_i32 = arith.constant 0 : i32
    %c0_i32_0 = arith.constant 0 : i32
    %c0_i32_1 = arith.constant 0 : i32
    return %c0_i32, %c0_i32_0 : i32, i32
  }
  func.func @transform_3(%arg0: i32) -> (i32, i32) {
    %c0_i32 = arith.constant 0 : i32
    %c0_i32_0 = arith.constant 0 : i32
    %c0_i32_1 = arith.constant 0 : i32
    return %c0_i32, %c0_i32_0 : i32, i32
  }
  func.func @transform_4(%arg0: i32) -> (i32, i32) {
    %c0_i32 = arith.constant 0 : i32
    %c0_i32_0 = arith.constant 0 : i32
    %c0_i32_1 = arith.constant 0 : i32
    return %c0_i32, %c0_i32_0 : i32, i32
  }
  func.func @transform_5(%arg0: i32) -> (i32, i32) {
    %c0_i32 = arith.constant 0 : i32
    %c0_i32_0 = arith.constant 0 : i32
    return %arg0, %c0_i32 : i32, i32
  }
}

</mosaic_0001>

<llo_original>
// kernel: tpu_custom_call.1
$region0: #{tpu_custom_call.1}
  #allocation0 [shape = 'u32[]', space=smem, size = 0x4, offset = 0x4, fixed_abs, tag = 'smem constant byte address 0x4 - core index']
  #allocation1 [shape = 'u32[144,128]{1,0:T(1,128)}', space=vmem, size = 0x12000, scoped, tag = 'internal scratch']
  %s0 = inlined_call_operand.vmem [shape: f32[1024,16], index: 0, kind: input, shape index: {}]
  %s1 = inlined_call_operand.vmem [shape: f32[16,128], index: 1, kind: input, shape index: {}]
  %s2 = inlined_call_operand.vmem [shape: f32[1,128], index: 2, kind: input, shape index: {}]
  %s3 = inlined_call_operand.vmem [shape: f32[128,128], index: 3, kind: input, shape index: {}]
  %s4 = inlined_call_operand.vmem [shape: f32[1,128], index: 4, kind: input, shape index: {}]
  %s5 = inlined_call_operand.hbm [shape: f32[1024,128], index: 5, kind: output, shape index: {}]
  %s6 = sld [smem:[#allocation0]]
  $region53: #{tpu_custom_call.1} parent=0
    _
  %s8 = ssub.s32 1, %s6
  %s9 = scalar_select 0, %s8, %s6
  $region1: #{tpu_custom_call.1} parent=0
    #allocation2 [shape = 'u8[262144]{0}', space=vmem, size = 0x40000, scoped, tag = 'output window, operand 0']
    #allocation3 [shape = 's32[2]{0}', space=sflag, size = 0x8, scoped, tag = 'scoped memory for tpu_custom_call.1']
    %10 = vsyncpa [#allocation3], 0
    %s11 = scalar_lea.sflag [#allocation3], 1
    %12 = vsyncpa %s11, 0
    loop: start=0, step=1, limit=6
    $region2: #{tpu_custom_call.1} parent=1 // loop_pre_header
      _
    $region3: #{tpu_custom_call.1} parent=1 // loop_header
      %s14 = sphi 0, %s18
      %p15 = scmp.ge.s32.totalorder %s14, 6
      %s24 = sphi 0, %s26
      %s27 = sphi 0, %s24
      %s28 = sphi 0, %s27
      %s44 = sphi 0, %s28
      %s48 = sphi 0, %s48
      %s50 = sphi 0, %s48
      %s51 = sphi 0, %s50
      %s65 = sphi 0, %s51
      %s69 = sphi 0, %s69
      %s71 = sphi 0, %s69
      %s72 = sphi 0, %s71
      %s86 = sphi 0, %s72
      %s90 = sphi 0, %s90
      %s92 = sphi 0, %s90
      %s93 = sphi 0, %s92
      %s107 = sphi 0, %s93
      %s111 = sphi 0, %s111
      %s113 = sphi 0, %s111
      %s114 = sphi 0, %s113
      %s128 = sphi 0, %s114
      %s134 = sphi 0, %s136
      %s137 = sphi 0, %s134
      %s138 = sphi 0, %s137
      %s154 = sphi 0, %s138
    $region4: #{tpu_custom_call.1} parent=1 // loop_header_branch
      %17 = sbr.rel (%p15) target = $region8
    $region5: #{tpu_custom_call.1} parent=1 // loop_body
      %s19 = ssub.s32 %s14, 1
      %s20 = ssub.s32 %s14, 2
      %s21 = sadd.s32 %s14, 1
      %s22 = ssub.s32 %s14, %s21
      %p23 = scmp.eq.s32.totalorder %s22, 0
      %s25 = sadd.s32 %s24, 1
      %s26 = scalar_select %p23, %s24, %s25
      %p29 = pneg %p23
      %p30 = scmp.eq.s32.totalorder %s14, 3
      %p31 = por %p29, %p30
      %p32 = scmp.ne.s32.totalorder %s24, %s27
      %p33 = scmp.eq.s32.totalorder %s14, 0
      %p34 = por %p32, %p33
      %p35 = scmp.ne.s32.totalorder %s24, %s27
      %p36 = scmp.eq.s32.totalorder %s19, 3
      %p37 = por %p35, %p36
      %p38 = scmp.ne.s32.totalorder %s27, %s28
      %p39 = scmp.eq.s32.totalorder %s19, 0
      %p40 = por %p38, %p39
      %p41 = scmp.ne.s32.totalorder %s27, %s28
      %p42 = scmp.eq.s32.totalorder %s20, 3
      %p43 = por %p41, %p42
      %p45 = scmp.ne.s32.totalorder %s28, %s44
      %p46 = scmp.eq.s32.totalorder %s20, 0
      %p47 = por %p45, %p46
      %s49 = sadd.s32 %s48, 1
      %p52 = scmp.eq.s32.totalorder %s14, 3
      %p53 = scmp.ne.s32.totalorder %s48, %s50
      %p54 = scmp.eq.s32.totalorder %s14, 0
      %p55 = por %p53, %p54
      %p56 = scmp.ne.s32.totalorder %s48, %s50
      %p57 = scmp.eq.s32.totalorder %s19, 3
      %p58 = por %p56, %p57
      %p59 = scmp.ne.s32.totalorder %s50, %s51
      %p60 = scmp.eq.s32.totalorder %s19, 0
      %p61 = por %p59, %p60
      %p62 = scmp.ne.s32.totalorder %s50, %s51
      %p63 = scmp.eq.s32.totalorder %s20, 3
      %p64 = por %p62, %p63
      %p66 = scmp.ne.s32.totalorder %s51, %s65
      %p67 = scmp.eq.s32.totalorder %s20, 0
      %p68 = por %p66, %p67
      %s70 = sadd.s32 %s69, 1
      %p73 = scmp.eq.s32.totalorder %s14, 3
      %p74 = scmp.ne.s32.totalorder %s69, %s71
      %p75 = scmp.eq.s32.totalorder %s14, 0
      %p76 = por %p74, %p75
      %p77 = scmp.ne.s32.totalorder %s69, %s71
      %p78 = scmp.eq.s32.totalorder %s19, 3
      %p79 = por %p77, %p78
      %p80 = scmp.ne.s32.totalorder %s71, %s72
      %p81 = scmp.eq.s32.totalorder %s19, 0
      %p82 = por %p80, %p81
      %p83 = scmp.ne.s32.totalorder %s71, %s72
      %p84 = scmp.eq.s32.totalorder %s20, 3
      %p85 = por %p83, %p84
      %p87 = scmp.ne.s32.totalorder %s72, %s86
      %p88 = scmp.eq.s32.totalorder %s20, 0
      %p89 = por %p87, %p88
      %s91 = sadd.s32 %s90, 1
      %p94 = scmp.eq.s32.totalorder %s14, 3
      %p95 = scmp.ne.s32.totalorder %s90, %s92
      %p96 = scmp.eq.s32.totalorder %s14, 0
      %p97 = por %p95, %p96
      %p98 = scmp.ne.s32.totalorder %s90, %s92
      %p99 = scmp.eq.s32.totalorder %s19, 3
      %p100 = por %p98, %p99
      %p101 = scmp.ne.s32.totalorder %s92, %s93
      %p102 = scmp.eq.s32.totalorder %s19, 0
      %p103 = por %p101, %p102
      %p104 = scmp.ne.s32.totalorder %s92, %s93
      %p105 = scmp.eq.s32.totalorder %s20, 3
      %p106 = por %p104, %p105
      %p108 = scmp.ne.s32.totalorder %s93, %s107
      %p109 = scmp.eq.s32.totalorder %s20, 0
      %p110 = por %p108, %p109
      %s112 = sadd.s32 %s111, 1
      %p115 = scmp.eq.s32.totalorder %s14, 3
      %p116 = scmp.ne.s32.totalorder %s111, %s113
      %p117 = scmp.eq.s32.totalorder %s14, 0
      %p118 = por %p116, %p117
      %p119 = scmp.ne.s32.totalorder %s111, %s113
      %p120 = scmp.eq.s32.totalorder %s19, 3
      %p121 = por %p119, %p120
      %p122 = scmp.ne.s32.totalorder %s113, %s114
      %p123 = scmp.eq.s32.totalorder %s19, 0
      %p124 = por %p122, %p123
      %p125 = scmp.ne.s32.totalorder %s113, %s114
      %p126 = scmp.eq.s32.totalorder %s20, 3
      %p127 = por %p125, %p126
      %p129 = scmp.ne.s32.totalorder %s114, %s128
      %p130 = scmp.eq.s32.totalorder %s20, 0
      %p131 = por %p129, %p130
      %s132 = ssub.s32 %s14, %s21
      %p133 = scmp.eq.s32.totalorder %s132, 0
      %s135 = sadd.s32 %s134, 1
      %s136 = scalar_select %p133, %s134, %s135
      %p139 = pneg %p133
      %p140 = scmp.eq.s32.totalorder %s14, 3
      %p141 = por %p139, %p140
      %p142 = scmp.ne.s32.totalorder %s134, %s137
      %p143 = scmp.eq.s32.totalorder %s14, 0
      %p144 = por %p142, %p143
      %p145 = scmp.ne.s32.totalorder %s134, %s137
      %p146 = scmp.eq.s32.totalorder %s19, 3
      %p147 = por %p145, %p146
      %p148 = scmp.ne.s32.totalorder %s137, %s138
      %p149 = scmp.eq.s32.totalorder %s19, 0
      %p150 = por %p148, %p149
      %p151 = scmp.ne.s32.totalorder %s137, %s138
      %p152 = scmp.eq.s32.totalorder %s20, 3
      %p153 = por %p151, %p152
      %p155 = scmp.ne.s32.totalorder %s138, %s154
      %p156 = scmp.eq.s32.totalorder %s20, 0
      %p157 = por %p155, %p156
      %p158 = scmp.le.s32.totalorder 1, %s14
      %p159 = scmp.lt.s32.totalorder %s14, 5
      %p160 = pnand %p158, %p159
      %p161 = pneg %p160
      // Predicated region
      $region9: #{tpu_custom_call.1} parent=5 // pred_check
        _
      $region10: #{tpu_custom_call.1} parent=5 // pred_check_branch
        %163 = sbr.rel (%p160) target = $region12
      $region11: #{tpu_custom_call.1} parent=5 // pred_region
        %s164 = ssub.s32 %s14, 1
        // Predicated region
        $region13: #{tpu_custom_call.1} parent=11 // pred_check
          %p165 = pneg %p61
        $region14: #{tpu_custom_call.1} parent=11 // pred_check_branch
          %167 = sbr.rel (%p165) target = $region16
        $region15: #{tpu_custom_call.1} parent=11 // pred_region
          _
        $region16: #{tpu_custom_call.1} parent=11 // pred_fallthru
          _
        // Predicated region
        $region17: #{tpu_custom_call.1} parent=11 // pred_check
          %p168 = pneg %p82
        $region18: #{tpu_custom_call.1} parent=11 // pred_check_branch
          %170 = sbr.rel (%p168) target = $region20
        $region19: #{tpu_custom_call.1} parent=11 // pred_region
          _
        $region20: #{tpu_custom_call.1} parent=11 // pred_fallthru
          _
        // Predicated region
        $region21: #{tpu_custom_call.1} parent=11 // pred_check
          %p171 = pneg %p103
        $region22: #{tpu_custom_call.1} parent=11 // pred_check_branch
          %173 = sbr.rel (%p171) target = $region24
        $region23: #{tpu_custom_call.1} parent=11 // pred_region
          _
        $region24: #{tpu_custom_call.1} parent=11 // pred_fallthru
          _
        // Predicated region
        $region25: #{tpu_custom_call.1} parent=11 // pred_check
          %p174 = pneg %p124
        $region26: #{tpu_custom_call.1} parent=11 // pred_check_branch
          %176 = sbr.rel (%p174) target = $region28
        $region27: #{tpu_custom_call.1} parent=11 // pred_region
          _
        $region28: #{tpu_custom_call.1} parent=11 // pred_fallthru
          _
      $region12: #{tpu_custom_call.1} parent=5 // pred_fallthru
        _
      %p177 = scmp.lt.s32.totalorder %s14, 4
      // Predicated region
      $region29: #{tpu_custom_call.1} parent=5 // pred_check
        %p178 = pneg %p177
      $region30: #{tpu_custom_call.1} parent=5 // pred_check_branch
        %180 = sbr.rel (%p178) target = $region32
      $region31: #{tpu_custom_call.1} parent=5 // pred_region
        // Predicated region
        $region33: #{tpu_custom_call.1} parent=31 // pred_check
          %p181 = pneg %p34
        $region34: #{tpu_custom_call.1} parent=31 // pred_check_branch
          %183 = sbr.rel (%p181) target = $region36
        $region35: #{tpu_custom_call.1} parent=31 // pred_region
          %s184 = smul.u32 32, %s14
          %p185 = scmp.lt.s32.totalorder %s184, 127
          %s186 = scalar_select %p185, %s184, 127
          %s187 = smul.addr %s186, 8
          %s188 = scalar_lea.vmem %s0, %s187
          %s189 = smul.u32 32, %s14
        $region36: #{tpu_custom_call.1} parent=31 // pred_fallthru
          _
      $region32: #{tpu_custom_call.1} parent=5 // pred_fallthru
        _
      %p190 = scmp.le.s32.totalorder 1, %s14
      %p191 = scmp.lt.s32.totalorder %s14, 5
      %p192 = pnand %p190, %p191
      %p193 = pneg %p192
      // Predicated region
      $region37: #{tpu_custom_call.1} parent=5 // pred_check
        _
      $region38: #{tpu_custom_call.1} parent=5 // pred_check_branch
        %195 = sbr.rel (%p192) target = $region40
      $region39: #{tpu_custom_call.1} parent=5 // pred_region
        %s196 = ssub.s32 %s14, 1
        %s197 = smul.u32 32, %s19
        %p198 = scmp.lt.s32.totalorder %s197, 127
        %s199 = scalar_select %p198, %s197, 127
        %s200 = smul.addr %s199, 8
        %s201 = scalar_lea.vmem %s0, %s200
        %p202 = pneg %p40
        %p203 = pneg %p37
        %p204 = pneg %p61
        %p205 = pneg %p58
        %p206 = pneg %p82
        %p207 = pneg %p79
        %p208 = pneg %p103
        %p209 = pneg %p100
        %p210 = pneg %p124
        %p211 = pneg %p121
        %p212 = pneg %p150
        %p213 = pneg %p147
        %s214 = sand.u32 %s137, 1
        %s215 = scalar_lea.sflag [#allocation3], %s214
        %s216 = sand.u32 %s137, 1
        %s217 = smul.addr %s216, 256
        %s218 = scalar_lea.vmem [#allocation2], %s217
        %s219 = smul.u32 32, %s19
        %p220 = scmp.lt.s32.totalorder %s219, 127
        %s221 = scalar_select %p220, %s219, 127
        %s222 = smul.addr %s221, 8
        %s223 = scalar_lea.vmem %s0, %s222
        %s224 = smul.u32 32, %s19
        %s225 = smul.u32 32, %s19
        %v226 = vld [vmem:[%s223] sm:$0xff]
        %v227 = vld [vmem:[%s223 + $0x8] sm:$0xff]
        %v228 = vld [vmem:[%s223 + $0x10] sm:$0xff]
        %v229 = vld [vmem:[%s223 + $0x18] sm:$0xff]
        %v230 = vld [vmem:[%s223 + $0x20] sm:$0xff]
        %v231 = vld [vmem:[%s223 + $0x28] sm:$0xff]
        %v232 = vld [vmem:[%s223 + $0x30] sm:$0xff]
        %v233 = vld [vmem:[%s223 + $0x38] sm:$0xff]
        %v234 = vld [vmem:[%s223 + $0x40] sm:$0xff]
        %v235 = vld [vmem:[%s223 + $0x48] sm:$0xff]
        %v236 = vld [vmem:[%s223 + $0x50] sm:$0xff]
        %v237 = vld [vmem:[%s223 + $0x58] sm:$0xff]
        %v238 = vld [vmem:[%s223 + $0x60] sm:$0xff]
        %v239 = vld [vmem:[%s223 + $0x68] sm:$0xff]
        %v240 = vld [vmem:[%s223 + $0x70] sm:$0xff]
        %v241 = vld [vmem:[%s223 + $0x78] sm:$0xff]
        %v242 = vld [vmem:[%s223 + $0x80] sm:$0xff]
        %v243 = vld [vmem:[%s223 + $0x88] sm:$0xff]
        %v244 = vld [vmem:[%s223 + $0x90] sm:$0xff]
        %v245 = vld [vmem:[%s223 + $0x98] sm:$0xff]
        %v246 = vld [vmem:[%s223 + $0xa0] sm:$0xff]
        %v247 = vld [vmem:[%s223 + $0xa8] sm:$0xff]
        %v248 = vld [vmem:[%s223 + $0xb0] sm:$0xff]
        %v249 = vld [vmem:[%s223 + $0xb8] sm:$0xff]
        %v250 = vld [vmem:[%s223 + $0xc0] sm:$0xff]
        %v251 = vld [vmem:[%s223 + $0xc8] sm:$0xff]
        %v252 = vld [vmem:[%s223 + $0xd0] sm:$0xff]
        %v253 = vld [vmem:[%s223 + $0xd8] sm:$0xff]
        %v254 = vld [vmem:[%s223 + $0xe0] sm:$0xff]
        %v255 = vld [vmem:[%s223 + $0xe8] sm:$0xff]
        %v256 = vld [vmem:[%s223 + $0xf0] sm:$0xff]
        %v257 = vld [vmem:[%s223 + $0xf8] sm:$0xff]
        %v258 = vld [vmem:[%s1] sm:$0xff]
        %v259 = vld [vmem:[%s1 + $0x8] sm:$0xff]
        %v260 = vld [vmem:[%s2] sm:$0x1]
        %v262 = vlaneseq
        %v263 = vshrl.u32 %v262, 7
        %v264 = vsub.s32 0, %v263
        %v265 = vrot.slane %v260, %v264
        %vm267 = vcmask 130048
        %v269 = vsel %vm267, %v226, 0
        %v272 = vsel %vm267, %v227, 0
        %v275 = vsel %vm267, %v228, 0
        %v278 = vsel %vm267, %v229, 0
        %v281 = vsel %vm267, %v230, 0
        %v284 = vsel %vm267, %v231, 0
        %v287 = vsel %vm267, %v232, 0
        %v290 = vsel %vm267, %v233, 0
        %v293 = vsel %vm267, %v234, 0
        %v296 = vsel %vm267, %v235, 0
        %v299 = vsel %vm267, %v236, 0
        %v302 = vsel %vm267, %v237, 0
        %v305 = vsel %vm267, %v238, 0
        %v308 = vsel %vm267, %v239, 0
        %v311 = vsel %vm267, %v240, 0
        %v314 = vsel %vm267, %v241, 0
        %v317 = vsel %vm267, %v242, 0
        %v320 = vsel %vm267, %v243, 0
        %v323 = vsel %vm267, %v244, 0
        %v326 = vsel %vm267, %v245, 0
        %v329 = vsel %vm267, %v246, 0
        %v332 = vsel %vm267, %v247, 0
        %v335 = vsel %vm267, %v248, 0
        %v338 = vsel %vm267, %v249, 0
        %v341 = vsel %vm267, %v250, 0
        %v344 = vsel %vm267, %v251, 0
        %v347 = vsel %vm267, %v252, 0
        %v350 = vsel %vm267, %v253, 0
        %v353 = vsel %vm267, %v254, 0
        %v356 = vsel %vm267, %v255, 0
        %v359 = vsel %vm267, %v256, 0
        %v362 = vsel %vm267, %v257, 0
        %364 = vmatprep.subr.mxu0 0.0
        %365 = vmatpush1.msra.mxu0 %v258
        %366 = vmatprep.subr.mxu0 0.0
        %367 = vmatpush1.msra.mxu0 %v259
        %368 = vmatprep.subr.mxu0 0.0
        %369 = vmatpush1.msra.mxu0 0.0
        %370 = vmatprep.subr.mxu0 0.0
        %371 = vmatpush1.msra.mxu0 0.0
        %372 = vmatprep.subr.mxu0 0.0
        %373 = vmatpush1.msra.mxu0 0.0
        %374 = vmatprep.subr.mxu0 0.0
        %375 = vmatpush1.msra.mxu0 0.0
        %376 = vmatprep.subr.mxu0 0.0
        %377 = vmatpush1.msra.mxu0 0.0
        %378 = vmatprep.subr.mxu0 0.0
        %379 = vmatpush1.msra.mxu0 0.0
        %380 = vmatprep.subr.mxu0 0.0
        %381 = vmatpush1.msra.mxu0 0.0
        %382 = vmatprep.subr.mxu0 0.0
        %383 = vmatpush1.msra.mxu0 0.0
        %384 = vmatprep.subr.mxu0 0.0
        %385 = vmatpush1.msra.mxu0 0.0
        %386 = vmatprep.subr.mxu0 0.0
        %387 = vmatpush1.msra.mxu0 0.0
        %388 = vmatprep.subr.mxu0 0.0
        %389 = vmatpush1.msra.mxu0 0.0
        %390 = vmatprep.subr.mxu0 0.0
        %391 = vmatpush1.msra.mxu0 0.0
        %392 = vmatprep.subr.mxu0 0.0
        %393 = vmatpush1.msra.mxu0 0.0
        %394 = vmatprep.subr.mxu0 0.0
        %395 = vmatpush1.msra.mxu0 0.0
        %396 = vmatprep.subr.mxu0 0.0
        %397 = vmatpush1.msra.mxu0 0.0
        %398 = vmatprep.subr.mxu0 0.0
        %399 = vmatpush1.msra.mxu0 0.0
        %400 = vmatprep.subr.mxu0 0.0
        %401 = vmatpush1.msra.mxu0 0.0
        %402 = vmatprep.subr.mxu0 0.0
        %403 = vmatpush1.msra.mxu0 0.0
        %404 = vmatprep.subr.mxu0 0.0
        %405 = vmatpush1.msra.mxu0 0.0
        %406 = vmatprep.subr.mxu0 0.0
        %407 = vmatpush1.msra.mxu0 0.0
        %408 = vmatprep.subr.mxu0 0.0
        %409 = vmatpush1.msra.mxu0 0.0
        %410 = vmatprep.subr.mxu0 0.0
        %411 = vmatpush1.msra.mxu0 0.0
        %412 = vmatprep.subr.mxu0 0.0
        %413 = vmatpush1.msra.mxu0 0.0
        %414 = vmatprep.subr.mxu0 0.0
        %415 = vmatpush1.msra.mxu0 0.0
        %416 = vmatprep.subr.mxu0 0.0
        %417 = vmatpush1.msra.mxu0 0.0
        %418 = vmatprep.subr.mxu0 0.0
        %419 = vmatpush1.msra.mxu0 0.0
        %420 = vmatprep.subr.mxu0 0.0
        %421 = vmatpush1.msra.mxu0 0.0
        %422 = vmatprep.subr.mxu0 0.0
        %423 = vmatpush1.msra.mxu0 0.0
        %424 = vmatprep.subr.mxu0 0.0
        %425 = vmatpush1.msra.mxu0 0.0
        %426 = vmatprep.subr.mxu0 0.0
        %427 = vmatpush1.msra.mxu0 0.0
        %428 = vmatprep.mubr.f32.mxu0 0.0
        %429 = vmatmul.mubr.f32.gmra.mrb[0].mxu0 %v269
        %v430 = vpop.f32.mrb[0].mxu0
        %v431 = vadd.f32 %v265, %v430
        %v432 = vpop.f32.mrb[0].mxu0
        %433 = vmatprep.mubr.f32.mxu0 0.0
        %434 = vmatmul.mubr.f32.gmra.mrb[0].mxu0 %v272
        %v435 = vpop.f32.mrb[0].mxu0
        %v436 = vadd.f32 %v265, %v435
        %v437 = vpop.f32.mrb[0].mxu0
        %438 = vmatprep.mubr.f32.mxu0 0.0
        %439 = vmatmul.mubr.f32.gmra.mrb[0].mxu0 %v275
        %v440 = vpop.f32.mrb[0].mxu0
        %v441 = vadd.f32 %v265, %v440
        %v442 = vpop.f32.mrb[0].mxu0
        %443 = vmatprep.mubr.f32.mxu0 0.0
        %444 = vmatmul.mubr.f32.gmra.mrb[0].mxu0 %v278
        %v445 = vpop.f32.mrb[0].mxu0
        %v446 = vadd.f32 %v265, %v445
        %v447 = vpop.f32.mrb[0].mxu0
        %448 = vmatprep.mubr.f32.mxu0 0.0
        %449 = vmatmul.mubr.f32.gmra.mrb[0].mxu0 %v281
        %v450 = vpop.f32.mrb[0].mxu0
        %v451 = vadd.f32 %v265, %v450
        %v452 = vpop.f32.mrb[0].mxu0
        %453 = vmatprep.mubr.f32.mxu0 0.0
        %454 = vmatmul.mubr.f32.gmra.mrb[0].mxu0 %v284
        %v455 = vpop.f32.mrb[0].mxu0
        %v456 = vadd.f32 %v265, %v455
        %v457 = vpop.f32.mrb[0].mxu0
        %458 = vmatprep.mubr.f32.mxu0 0.0
        %459 = vmatmul.mubr.f32.gmra.mrb[0].mxu0 %v287
        %v460 = vpop.f32.mrb[0].mxu0
        %v461 = vadd.f32 %v265, %v460
        %v462 = vpop.f32.mrb[0].mxu0
        %463 = vmatprep.mubr.f32.mxu0 0.0
        %464 = vmatmul.mubr.f32.gmra.mrb[0].mxu0 %v290
        %v465 = vpop.f32.mrb[0].mxu0
        %v466 = vadd.f32 %v265, %v465
        %v467 = vpop.f32.mrb[0].mxu0
        %468 = vmatprep.mubr.f32.mxu0 0.0
        %469 = vmatmul.mubr.f32.gmra.mrb[0].mxu0 %v293
        %v470 = vpop.f32.mrb[0].mxu0
        %v471 = vadd.f32 %v265, %v470
        %v472 = vpop.f32.mrb[0].mxu0
        %473 = vmatprep.mubr.f32.mxu0 0.0
        %474 = vmatmul.mubr.f32.gmra.mrb[0].mxu0 %v296
        %v475 = vpop.f32.mrb[0].mxu0
        %v476 = vadd.f32 %v265, %v475
        %v477 = vpop.f32.mrb[0].mxu0
        %478 = vmatprep.mubr.f32.mxu0 0.0
        %479 = vmatmul.mubr.f32.gmra.mrb[0].mxu0 %v299
        %v480 = vpop.f32.mrb[0].mxu0
        %v481 = vadd.f32 %v265, %v480
        %v482 = vpop.f32.mrb[0].mxu0
        %483 = vmatprep.mubr.f32.mxu0 0.0
        %484 = vmatmul.mubr.f32.gmra.mrb[0].mxu0 %v302
        %v485 = vpop.f32.mrb[0].mxu0
        %v486 = vadd.f32 %v265, %v485
        %v487 = vpop.f32.mrb[0].mxu0
        %488 = vmatprep.mubr.f32.mxu0 0.0
        %489 = vmatmul.mubr.f32.gmra.mrb[0].mxu0 %v305
        %v490 = vpop.f32.mrb[0].mxu0
        %v491 = vadd.f32 %v265, %v490
        %v492 = vpop.f32.mrb[0].mxu0
        %493 = vmatprep.mubr.f32.mxu0 0.0
        %494 = vmatmul.mubr.f32.gmra.mrb[0].mxu0 %v308
        %v495 = vpop.f32.mrb[0].mxu0
        %v496 = vadd.f32 %v265, %v495
        %v497 = vpop.f32.mrb[0].mxu0
        %498 = vmatprep.mubr.f32.mxu0 0.0
        %499 = vmatmul.mubr.f32.gmra.mrb[0].mxu0 %v311
        %v500 = vpop.f32.mrb[0].mxu0
        %v501 = vadd.f32 %v265, %v500
        %v502 = vpop.f32.mrb[0].mxu0
        %503 = vmatprep.mubr.f32.mxu0 0.0
        %504 = vmatmul.mubr.f32.gmra.mrb[0].mxu0 %v314
        %v505 = vpop.f32.mrb[0].mxu0
        %v506 = vadd.f32 %v265, %v505
        %v507 = vpop.f32.mrb[0].mxu0
        %508 = vmatprep.mubr.f32.mxu0 0.0
        %509 = vmatmul.mubr.f32.gmra.mrb[0].mxu0 %v317
        %v510 = vpop.f32.mrb[0].mxu0
        %v511 = vadd.f32 %v265, %v510
        %v512 = vpop.f32.mrb[0].mxu0
        %513 = vmatprep.mubr.f32.mxu0 0.0
        %514 = vmatmul.mubr.f32.gmra.mrb[0].mxu0 %v320
        %v515 = vpop.f32.mrb[0].mxu0
        %v516 = vadd.f32 %v265, %v515
        %v517 = vpop.f32.mrb[0].mxu0
        %518 = vmatprep.mubr.f32.mxu0 0.0
        %519 = vmatmul.mubr.f32.gmra.mrb[0].mxu0 %v323
        %v520 = vpop.f32.mrb[0].mxu0
        %v521 = vadd.f32 %v265, %v520
        %v522 = vpop.f32.mrb[0].mxu0
        %523 = vmatprep.mubr.f32.mxu0 0.0
        %524 = vmatmul.mubr.f32.gmra.mrb[0].mxu0 %v326
        %v525 = vpop.f32.mrb[0].mxu0
        %v526 = vadd.f32 %v265, %v525
        %v527 = vpop.f32.mrb[0].mxu0
        %528 = vmatprep.mubr.f32.mxu0 0.0
        %529 = vmatmul.mubr.f32.gmra.mrb[0].mxu0 %v329
        %v530 = vpop.f32.mrb[0].mxu0
        %v531 = vadd.f32 %v265, %v530
        %v532 = vpop.f32.mrb[0].mxu0
        %533 = vmatprep.mubr.f32.mxu0 0.0
        %534 = vmatmul.mubr.f32.gmra.mrb[0].mxu0 %v332
        %v535 = vpop.f32.mrb[0].mxu0
        %v536 = vadd.f32 %v265, %v535
        %v537 = vpop.f32.mrb[0].mxu0
        %538 = vmatprep.mubr.f32.mxu0 0.0
        %539 = vmatmul.mubr.f32.gmra.mrb[0].mxu0 %v335
        %v540 = vpop.f32.mrb[0].mxu0
        %v541 = vadd.f32 %v265, %v540
        %v542 = vpop.f32.mrb[0].mxu0
        %543 = vmatprep.mubr.f32.mxu0 0.0
        %544 = vmatmul.mubr.f32.gmra.mrb[0].mxu0 %v338
        %v545 = vpop.f32.mrb[0].mxu0
        %v546 = vadd.f32 %v265, %v545
        %v547 = vpop.f32.mrb[0].mxu0
        %548 = vmatprep.mubr.f32.mxu0 0.0
        %549 = vmatmul.mubr.f32.gmra.mrb[0].mxu0 %v341
        %v550 = vpop.f32.mrb[0].mxu0
        %v551 = vadd.f32 %v265, %v550
        %v552 = vpop.f32.mrb[0].mxu0
        %553 = vmatprep.mubr.f32.mxu0 0.0
        %554 = vmatmul.mubr.f32.gmra.mrb[0].mxu0 %v344
        %v555 = vpop.f32.mrb[0].mxu0
        %v556 = vadd.f32 %v265, %v555
        %v557 = vpop.f32.mrb[0].mxu0
        %558 = vmatprep.mubr.f32.mxu0 0.0
        %559 = vmatmul.mubr.f32.gmra.mrb[0].mxu0 %v347
        %v560 = vpop.f32.mrb[0].mxu0
        %v561 = vadd.f32 %v265, %v560
        %v562 = vpop.f32.mrb[0].mxu0
        %563 = vmatprep.mubr.f32.mxu0 0.0
        %564 = vmatmul.mubr.f32.gmra.mrb[0].mxu0 %v350
        %v565 = vpop.f32.mrb[0].mxu0
        %v566 = vadd.f32 %v265, %v565
        %v567 = vpop.f32.mrb[0].mxu0
        %568 = vmatprep.mubr.f32.mxu0 0.0
        %569 = vmatmul.mubr.f32.gmra.mrb[0].mxu0 %v353
        %v570 = vpop.f32.mrb[0].mxu0
        %v571 = vadd.f32 %v265, %v570
        %v572 = vpop.f32.mrb[0].mxu0
        %573 = vmatprep.mubr.f32.mxu0 0.0
        %574 = vmatmul.mubr.f32.gmra.mrb[0].mxu0 %v356
        %v575 = vpop.f32.mrb[0].mxu0
        %v576 = vadd.f32 %v265, %v575
        %v577 = vpop.f32.mrb[0].mxu0
        %578 = vmatprep.mubr.f32.mxu0 0.0
        %579 = vmatmul.mubr.f32.gmra.mrb[0].mxu0 %v359
        %v580 = vpop.f32.mrb[0].mxu0
        %v581 = vadd.f32 %v265, %v580
        %v582 = vpop.f32.mrb[0].mxu0
        %583 = vmatprep.mubr.f32.mxu0 0.0
        %584 = vmatmul.mubr.f32.gmra.mrb[0].mxu0 %v362
        %v585 = vpop.f32.mrb[0].mxu0
        %v586 = vadd.f32 %v265, %v585
        %v587 = vpop.f32.mrb[0].mxu0
        %588 = vdwg.mxu0
        %v589 = vmax.f32 %v431, 0.0
        %v590 = vmax.f32 %v436, 0.0
        %v591 = vmax.f32 %v441, 0.0
        %v592 = vmax.f32 %v446, 0.0
        %v593 = vmax.f32 %v451, 0.0
        %v594 = vmax.f32 %v456, 0.0
        %v595 = vmax.f32 %v461, 0.0
        %v596 = vmax.f32 %v466, 0.0
        %v597 = vmax.f32 %v471, 0.0
        %v598 = vmax.f32 %v476, 0.0
        %v599 = vmax.f32 %v481, 0.0
        %v600 = vmax.f32 %v486, 0.0
        %v601 = vmax.f32 %v491, 0.0
        %v602 = vmax.f32 %v496, 0.0
        %v603 = vmax.f32 %v501, 0.0
        %v604 = vmax.f32 %v506, 0.0
        %v605 = vmax.f32 %v511, 0.0
        %v606 = vmax.f32 %v516, 0.0
        %v607 = vmax.f32 %v521, 0.0
        %v608 = vmax.f32 %v526, 0.0
        %v609 = vmax.f32 %v531, 0.0
        %v610 = vmax.f32 %v536, 0.0
        %v611 = vmax.f32 %v541, 0.0
        %v612 = vmax.f32 %v546, 0.0
        %v613 = vmax.f32 %v551, 0.0
        %v614 = vmax.f32 %v556, 0.0
        %v615 = vmax.f32 %v561, 0.0
        %v616 = vmax.f32 %v566, 0.0
        %v617 = vmax.f32 %v571, 0.0
        %v618 = vmax.f32 %v576, 0.0
        %v619 = vmax.f32 %v581, 0.0
        %v620 = vmax.f32 %v586, 0.0
        %v621 = vld [vmem:[%s3] sm:$0xff]
        %v622 = vld [vmem:[%s3 + $0x8] sm:$0xff]
        %v623 = vld [vmem:[%s3 + $0x10] sm:$0xff]
        %v624 = vld [vmem:[%s3 + $0x18] sm:$0xff]
        %v625 = vld [vmem:[%s3 + $0x20] sm:$0xff]
        %v626 = vld [vmem:[%s3 + $0x28] sm:$0xff]
        %v627 = vld [vmem:[%s3 + $0x30] sm:$0xff]
        %v628 = vld [vmem:[%s3 + $0x38] sm:$0xff]
        %v629 = vld [vmem:[%s3 + $0x40] sm:$0xff]
        %v630 = vld [vmem:[%s3 + $0x48] sm:$0xff]
        %v631 = vld [vmem:[%s3 + $0x50] sm:$0xff]
        %v632 = vld [vmem:[%s3 + $0x58] sm:$0xff]
        %v633 = vld [vmem:[%s3 + $0x60] sm:$0xff]
        %v634 = vld [vmem:[%s3 + $0x68] sm:$0xff]
        %v635 = vld [vmem:[%s3 + $0x70] sm:$0xff]
        %v636 = vld [vmem:[%s3 + $0x78] sm:$0xff]
        %v637 = vld [vmem:[%s4] sm:$0x1]
        %v639 = vlaneseq
        %v640 = vshrl.u32 %v639, 7
        %v641 = vsub.s32 0, %v640
        %v642 = vrot.slane %v637, %v641
        %644 = vmatprep.subr.mxu0 0.0
        %645 = vmatpush1.msra.mxu0 %v621
        %646 = vmatprep.subr.mxu0 0.0
        %647 = vmatpush1.msra.mxu0 %v622
        %648 = vmatprep.subr.mxu0 0.0
        %649 = vmatpush1.msra.mxu0 %v623
        %650 = vmatprep.subr.mxu0 0.0
        %651 = vmatpush1.msra.mxu0 %v624
        %652 = vmatprep.subr.mxu0 0.0
        %653 = vmatpush1.msra.mxu0 %v625
        %654 = vmatprep.subr.mxu0 0.0
        %655 = vmatpush1.msra.mxu0 %v626
        %656 = vmatprep.subr.mxu0 0.0
        %657 = vmatpush1.msra.mxu0 %v627
        %658 = vmatprep.subr.mxu0 0.0
        %659 = vmatpush1.msra.mxu0 %v628
        %660 = vmatprep.subr.mxu0 0.0
        %661 = vmatpush1.msra.mxu0 %v629
        %662 = vmatprep.subr.mxu0 0.0
        %663 = vmatpush1.msra.mxu0 %v630
        %664 = vmatprep.subr.mxu0 0.0
        %665 = vmatpush1.msra.mxu0 %v631
        %666 = vmatprep.subr.mxu0 0.0
        %667 = vmatpush1.msra.mxu0 %v632
        %668 = vmatprep.subr.mxu0 0.0
        %669 = vmatpush1.msra.mxu0 %v633
        %670 = vmatprep.subr.mxu0 0.0
        %671 = vmatpush1.msra.mxu0 %v634
        %672 = vmatprep.subr.mxu0 0.0
        %673 = vmatpush1.msra.mxu0 %v635
        %674 = vmatprep.subr.mxu0 0.0
        %675 = vmatpush1.msra.mxu0 %v636
        %676 = vmatprep.subr.mxu0 0.0
        %677 = vmatpush1.msra.mxu0 0.0
        %678 = vmatprep.subr.mxu0 0.0
        %679 = vmatpush1.msra.mxu0 0.0
        %680 = vmatprep.subr.mxu0 0.0
        %681 = vmatpush1.msra.mxu0 0.0
        %682 = vmatprep.subr.mxu0 0.0
        %683 = vmatpush1.msra.mxu0 0.0
        %684 = vmatprep.subr.mxu0 0.0
        %685 = vmatpush1.msra.mxu0 0.0
        %686 = vmatprep.subr.mxu0 0.0
        %687 = vmatpush1.msra.mxu0 0.0
        %688 = vmatprep.subr.mxu0 0.0
        %689 = vmatpush1.msra.mxu0 0.0
        %690 = vmatprep.subr.mxu0 0.0
        %691 = vmatpush1.msra.mxu0 0.0
        %692 = vmatprep.subr.mxu0 0.0
        %693 = vmatpush1.msra.mxu0 0.0
        %694 = vmatprep.subr.mxu0 0.0
        %695 = vmatpush1.msra.mxu0 0.0
        %696 = vmatprep.subr.mxu0 0.0
        %697 = vmatpush1.msra.mxu0 0.0
        %698 = vmatprep.subr.mxu0 0.0
        %699 = vmatpush1.msra.mxu0 0.0
        %700 = vmatprep.subr.mxu0 0.0
        %701 = vmatpush1.msra.mxu0 0.0
        %702 = vmatprep.subr.mxu0 0.0
        %703 = vmatpush1.msra.mxu0 0.0
        %704 = vmatprep.subr.mxu0 0.0
        %705 = vmatpush1.msra.mxu0 0.0
        %706 = vmatprep.subr.mxu0 0.0
        %707 = vmatpush1.msra.mxu0 0.0
        %708 = vmatprep.mubr.f32.mxu0 0.0
        %709 = vmatmul.mubr.f32.gmra.mrb[0].mxu0 %v589
        %v710 = vpop.f32.mrb[0].mxu0
        %v711 = vadd.f32 %v642, %v710
        %v712 = vpop.f32.mrb[0].mxu0
        %713 = vmatprep.mubr.f32.mxu0 0.0
        %714 = vmatmul.mubr.f32.gmra.mrb[0].mxu0 %v590
        %v715 = vpop.f32.mrb[0].mxu0
        %v716 = vadd.f32 %v642, %v715
        %v717 = vpop.f32.mrb[0].mxu0
        %718 = vmatprep.mubr.f32.mxu0 0.0
        %719 = vmatmul.mubr.f32.gmra.mrb[0].mxu0 %v591
        %v720 = vpop.f32.mrb[0].mxu0
        %v721 = vadd.f32 %v642, %v720
        %v722 = vpop.f32.mrb[0].mxu0
        %723 = vmatprep.mubr.f32.mxu0 0.0
        %724 = vmatmul.mubr.f32.gmra.mrb[0].mxu0 %v592
        %v725 = vpop.f32.mrb[0].mxu0
        %v726 = vadd.f32 %v642, %v725
        %v727 = vpop.f32.mrb[0].mxu0
        %728 = vmatprep.mubr.f32.mxu0 0.0
        %729 = vmatmul.mubr.f32.gmra.mrb[0].mxu0 %v593
        %v730 = vpop.f32.mrb[0].mxu0
        %v731 = vadd.f32 %v642, %v730
        %v732 = vpop.f32.mrb[0].mxu0
        %733 = vmatprep.mubr.f32.mxu0 0.0
        %734 = vmatmul.mubr.f32.gmra.mrb[0].mxu0 %v594
        %v735 = vpop.f32.mrb[0].mxu0
        %v736 = vadd.f32 %v642, %v735
        %v737 = vpop.f32.mrb[0].mxu0
        %738 = vmatprep.mubr.f32.mxu0 0.0
        %739 = vmatmul.mubr.f32.gmra.mrb[0].mxu0 %v595
        %v740 = vpop.f32.mrb[0].mxu0
        %v741 = vadd.f32 %v642, %v740
        %v742 = vpop.f32.mrb[0].mxu0
        %743 = vmatprep.mubr.f32.mxu0 0.0
        %744 = vmatmul.mubr.f32.gmra.mrb[0].mxu0 %v596
        %v745 = vpop.f32.mrb[0].mxu0
        %v746 = vadd.f32 %v642, %v745
        %v747 = vpop.f32.mrb[0].mxu0
        %748 = vmatprep.mubr.f32.mxu0 0.0
        %749 = vmatmul.mubr.f32.gmra.mrb[0].mxu0 %v597
        %v750 = vpop.f32.mrb[0].mxu0
        %v751 = vadd.f32 %v642, %v750
        %v752 = vpop.f32.mrb[0].mxu0
        %753 = vmatprep.mubr.f32.mxu0 0.0
        %754 = vmatmul.mubr.f32.gmra.mrb[0].mxu0 %v598
        %v755 = vpop.f32.mrb[0].mxu0
        %v756 = vadd.f32 %v642, %v755
        %v757 = vpop.f32.mrb[0].mxu0
        %758 = vmatprep.mubr.f32.mxu0 0.0
        %759 = vmatmul.mubr.f32.gmra.mrb[0].mxu0 %v599
        %v760 = vpop.f32.mrb[0].mxu0
        %v761 = vadd.f32 %v642, %v760
        %v762 = vpop.f32.mrb[0].mxu0
        %763 = vmatprep.mubr.f32.mxu0 0.0
        %764 = vmatmul.mubr.f32.gmra.mrb[0].mxu0 %v600
        %v765 = vpop.f32.mrb[0].mxu0
        %v766 = vadd.f32 %v642, %v765
        %v767 = vpop.f32.mrb[0].mxu0
        %768 = vmatprep.mubr.f32.mxu0 0.0
        %769 = vmatmul.mubr.f32.gmra.mrb[0].mxu0 %v601
        %v770 = vpop.f32.mrb[0].mxu0
        %v771 = vadd.f32 %v642, %v770
        %v772 = vpop.f32.mrb[0].mxu0
        %773 = vmatprep.mubr.f32.mxu0 0.0
        %774 = vmatmul.mubr.f32.gmra.mrb[0].mxu0 %v602
        %v775 = vpop.f32.mrb[0].mxu0
        %v776 = vadd.f32 %v642, %v775
        %v777 = vpop.f32.mrb[0].mxu0
        %778 = vmatprep.mubr.f32.mxu0 0.0
        %779 = vmatmul.mubr.f32.gmra.mrb[0].mxu0 %v603
        %v780 = vpop.f32.mrb[0].mxu0
        %v781 = vadd.f32 %v642, %v780
        %v782 = vpop.f32.mrb[0].mxu0
        %783 = vmatprep.mubr.f32.mxu0 0.0
        %784 = vmatmul.mubr.f32.gmra.mrb[0].mxu0 %v604
        %v785 = vpop.f32.mrb[0].mxu0
        %v786 = vadd.f32 %v642, %v785
        %v787 = vpop.f32.mrb[0].mxu0
        %788 = vmatprep.mubr.f32.mxu0 0.0
        %789 = vmatmul.mubr.f32.gmra.mrb[0].mxu0 %v605
        %v790 = vpop.f32.mrb[0].mxu0
        %v791 = vadd.f32 %v642, %v790
        %v792 = vpop.f32.mrb[0].mxu0
        %793 = vmatprep.mubr.f32.mxu0 0.0
        %794 = vmatmul.mubr.f32.gmra.mrb[0].mxu0 %v606
        %v795 = vpop.f32.mrb[0].mxu0
        %v796 = vadd.f32 %v642, %v795
        %v797 = vpop.f32.mrb[0].mxu0
        %798 = vmatprep.mubr.f32.mxu0 0.0
        %799 = vmatmul.mubr.f32.gmra.mrb[0].mxu0 %v607
        %v800 = vpop.f32.mrb[0].mxu0
        %v801 = vadd.f32 %v642, %v800
        %v802 = vpop.f32.mrb[0].mxu0
        %803 = vmatprep.mubr.f32.mxu0 0.0
        %804 = vmatmul.mubr.f32.gmra.mrb[0].mxu0 %v608
        %v805 = vpop.f32.mrb[0].mxu0
        %v806 = vadd.f32 %v642, %v805
        %v807 = vpop.f32.mrb[0].mxu0
        %808 = vmatprep.mubr.f32.mxu0 0.0
        %809 = vmatmul.mubr.f32.gmra.mrb[0].mxu0 %v609
        %v810 = vpop.f32.mrb[0].mxu0
        %v811 = vadd.f32 %v642, %v810
        %v812 = vpop.f32.mrb[0].mxu0
        %813 = vmatprep.mubr.f32.mxu0 0.0
        %814 = vmatmul.mubr.f32.gmra.mrb[0].mxu0 %v610
        %v815 = vpop.f32.mrb[0].mxu0
        %v816 = vadd.f32 %v642, %v815
        %v817 = vpop.f32.mrb[0].mxu0
        %818 = vmatprep.mubr.f32.mxu0 0.0
        %819 = vmatmul.mubr.f32.gmra.mrb[0].mxu0 %v611
        %v820 = vpop.f32.mrb[0].mxu0
        %v821 = vadd.f32 %v642, %v820
        %v822 = vpop.f32.mrb[0].mxu0
        %823 = vmatprep.mubr.f32.mxu0 0.0
        %824 = vmatmul.mubr.f32.gmra.mrb[0].mxu0 %v612
        %v825 = vpop.f32.mrb[0].mxu0
        %v826 = vadd.f32 %v642, %v825
        %v827 = vpop.f32.mrb[0].mxu0
        %828 = vmatprep.mubr.f32.mxu0 0.0
        %829 = vmatmul.mubr.f32.gmra.mrb[0].mxu0 %v613
        %v830 = vpop.f32.mrb[0].mxu0
        %v831 = vadd.f32 %v642, %v830
        %v832 = vpop.f32.mrb[0].mxu0
        %833 = vmatprep.mubr.f32.mxu0 0.0
        %834 = vmatmul.mubr.f32.gmra.mrb[0].mxu0 %v614
        %v835 = vpop.f32.mrb[0].mxu0
        %v836 = vadd.f32 %v642, %v835
        %v837 = vpop.f32.mrb[0].mxu0
        %838 = vmatprep.mubr.f32.mxu0 0.0
        %839 = vmatmul.mubr.f32.gmra.mrb[0].mxu0 %v615
        %v840 = vpop.f32.mrb[0].mxu0
        %v841 = vadd.f32 %v642, %v840
        %v842 = vpop.f32.mrb[0].mxu0
        %843 = vmatprep.mubr.f32.mxu0 0.0
        %844 = vmatmul.mubr.f32.gmra.mrb[0].mxu0 %v616
        %v845 = vpop.f32.mrb[0].mxu0
        %v846 = vadd.f32 %v642, %v845
        %v847 = vpop.f32.mrb[0].mxu0
        %848 = vmatprep.mubr.f32.mxu0 0.0
        %849 = vmatmul.mubr.f32.gmra.mrb[0].mxu0 %v617
        %v850 = vpop.f32.mrb[0].mxu0
        %v851 = vadd.f32 %v642, %v850
        %v852 = vpop.f32.mrb[0].mxu0
        %853 = vmatprep.mubr.f32.mxu0 0.0
        %854 = vmatmul.mubr.f32.gmra.mrb[0].mxu0 %v618
        %v855 = vpop.f32.mrb[0].mxu0
        %v856 = vadd.f32 %v642, %v855
        %v857 = vpop.f32.mrb[0].mxu0
        %858 = vmatprep.mubr.f32.mxu0 0.0
        %859 = vmatmul.mubr.f32.gmra.mrb[0].mxu0 %v619
        %v860 = vpop.f32.mrb[0].mxu0
        %v861 = vadd.f32 %v642, %v860
        %v862 = vpop.f32.mrb[0].mxu0
        %863 = vmatprep.mubr.f32.mxu0 0.0
        %864 = vmatmul.mubr.f32.gmra.mrb[0].mxu0 %v620
        %v865 = vpop.f32.mrb[0].mxu0
        %v866 = vadd.f32 %v642, %v865
        %v867 = vpop.f32.mrb[0].mxu0
        %868 = vdwg.mxu0
        %869 = vst [vmem:[%s218] sm:$0xff] %v711
        %870 = vst [vmem:[%s218 + $0x8] sm:$0xff] %v716
        %871 = vst [vmem:[%s218 + $0x10] sm:$0xff] %v721
        %872 = vst [vmem:[%s218 + $0x18] sm:$0xff] %v726
        %873 = vst [vmem:[%s218 + $0x20] sm:$0xff] %v731
        %874 = vst [vmem:[%s218 + $0x28] sm:$0xff] %v736
        %875 = vst [vmem:[%s218 + $0x30] sm:$0xff] %v741
        %876 = vst [vmem:[%s218 + $0x38] sm:$0xff] %v746
        %877 = vst [vmem:[%s218 + $0x40] sm:$0xff] %v751
        %878 = vst [vmem:[%s218 + $0x48] sm:$0xff] %v756
        %879 = vst [vmem:[%s218 + $0x50] sm:$0xff] %v761
        %880 = vst [vmem:[%s218 + $0x58] sm:$0xff] %v766
        %881 = vst [vmem:[%s218 + $0x60] sm:$0xff] %v771
        %882 = vst [vmem:[%s218 + $0x68] sm:$0xff] %v776
        %883 = vst [vmem:[%s218 + $0x70] sm:$0xff] %v781
        %884 = vst [vmem:[%s218 + $0x78] sm:$0xff] %v786
        %885 = vst [vmem:[%s218 + $0x80] sm:$0xff] %v791
        %886 = vst [vmem:[%s218 + $0x88] sm:$0xff] %v796
        %887 = vst [vmem:[%s218 + $0x90] sm:$0xff] %v801
        %888 = vst [vmem:[%s218 + $0x98] sm:$0xff] %v806
        %889 = vst [vmem:[%s218 + $0xa0] sm:$0xff] %v811
        %890 = vst [vmem:[%s218 + $0xa8] sm:$0xff] %v816
        %891 = vst [vmem:[%s218 + $0xb0] sm:$0xff] %v821
        %892 = vst [vmem:[%s218 + $0xb8] sm:$0xff] %v826
        %893 = vst [vmem:[%s218 + $0xc0] sm:$0xff] %v831
        %894 = vst [vmem:[%s218 + $0xc8] sm:$0xff] %v836
        %895 = vst [vmem:[%s218 + $0xd0] sm:$0xff] %v841
        %896 = vst [vmem:[%s218 + $0xd8] sm:$0xff] %v846
        %897 = vst [vmem:[%s218 + $0xe0] sm:$0xff] %v851
        %898 = vst [vmem:[%s218 + $0xe8] sm:$0xff] %v856
        %899 = vst [vmem:[%s218 + $0xf0] sm:$0xff] %v861
        %900 = vst [vmem:[%s218 + $0xf8] sm:$0xff] %v866
        %s901 = sand.u32 %s137, 1
        %s902 = scalar_lea.sflag [#allocation3], %s901
        %s903 = sand.u32 %s137, 1
        %s904 = smul.addr %s903, 256
        %s905 = scalar_lea.vmem [#allocation2], %s904
        // Predicated region
        $region41: #{tpu_custom_call.1} parent=39 // pred_check
          %p906 = pneg %p147
        $region42: #{tpu_custom_call.1} parent=39 // pred_check_branch
          %908 = sbr.rel (%p906) target = $region44
        $region43: #{tpu_custom_call.1} parent=39 // pred_region
          %s909 = smul.u32 32, %s19
          %s911 = ssub.s32 4096, 4096
          %912 = vsyncadd %s902, %s911
          %s913 = smul.addr %s909, 128
          %s914 = scalar_lea.hbm %s5, %s913
          %s915 = sshll.u32 %s905, 4
          %s916 = int_to_ptr.vmem [resolvable:$true] %s915
          %921 = dma.vmem_to_hbm [thread:$0]  %s916, 4096, %s914, %s902, 128, 128, 8
        $region44: #{tpu_custom_call.1} parent=39 // pred_fallthru
          _
      $region40: #{tpu_custom_call.1} parent=5 // pred_fallthru
        _
      %p922 = scmp.le.s32.totalorder 2, %s14
      // Predicated region
      $region45: #{tpu_custom_call.1} parent=5 // pred_check
        %p923 = pneg %p922
      $region46: #{tpu_custom_call.1} parent=5 // pred_check_branch
        %925 = sbr.rel (%p923) target = $region48
      $region47: #{tpu_custom_call.1} parent=5 // pred_region
        %s926 = ssub.s32 %s14, 2
        // Predicated region
        $region49: #{tpu_custom_call.1} parent=47 // pred_check
          %p927 = pneg %p153
        $region50: #{tpu_custom_call.1} parent=47 // pred_check_branch
          %929 = sbr.rel (%p927) target = $region52
        $region51: #{tpu_custom_call.1} parent=47 // pred_region
          %s930 = sand.u32 %s138, 1
          %s931 = scalar_lea.sflag [#allocation3], %s930
          %s932 = sand.u32 %s138, 1
          %s933 = smul.addr %s932, 256
          %s934 = scalar_lea.vmem [#allocation2], %s933
          %935 = dma.done %s931, 4096
        $region52: #{tpu_custom_call.1} parent=47 // pred_fallthru
          _
      $region48: #{tpu_custom_call.1} parent=5 // pred_fallthru
        _
    $region6: #{tpu_custom_call.1} parent=1 // loop_footer
      %s18 = sadd.s32 1, %s14
    $region7: #{tpu_custom_call.1} parent=1 // loop_footer_branch
      %13 = sbr.rel target = $region3
    $region8: #{tpu_custom_call.1} parent=1 // loop_exit
      _
    %936 = vsyncpa [#allocation3], 1
    %s937 = scalar_lea.sflag [#allocation3], 1
    %938 = vsyncpa %s937, 1

</llo_original>
